<compile_context>
chip_gen: v5e
topology: v5e:2x2
jax: 0.10.0
libtpu: 0.0.40
codegen_flags: <defaults>
</compile_context>

<pallas_src>
import functools

import jax
import jax.numpy as jnp
from jax.experimental import pallas as pl
from jax.experimental.pallas import tpu as pltpu

SIGMA_MIN = 1e-3
LANES = 128


def _round_up(n, m):
    return ((n + m - 1) // m) * m


# ------------------------------- kernel ------------------------------------


def ac_nn_kernel(x_ref, w1_ref, w2_ref, out_ref, *, n_out, ones_lane):
    # Layer 1 (critic | actor fused). x already carries a 1.0 column so the
    # matmul adds the layer-1 biases as well.
    x = x_ref[...]                                                     # [TB, K_pad]
    h = jnp.dot(x, w1_ref[...], preferred_element_type=jnp.float32)   # [TB, 128]
    h = jnp.clip(h, 0.0, 6.0)                                          # relu6; padded lanes stay 0

    lane = jax.lax.broadcasted_iota(jnp.int32, h.shape, 1)
    # Inject a ones-lane (at lane 2H) so the fused head matmul adds its biases.
    h = jnp.where(lane == ones_lane, 1.0, h)

    # Fused head matmul: col 0 = v, cols 1..n_out = mu_pre, next n_out = sigma_pre.
    o = jnp.dot(h, w2_ref[...], preferred_element_type=jnp.float32)   # [TB, 128]

    # Transcendentals computed column-masked on the single lane-dense slab
    # (EUP slot is otherwise idle; lanes >= 1+2*n_out are discarded by wrapper).
    mu = 3.0 * jnp.tanh(o)
    sigma = jnp.maximum(o, 0.0) + jnp.log1p(jnp.exp(-jnp.abs(o))) + SIGMA_MIN
    out_ref[...] = jnp.where(lane == 0, o, jnp.where(lane <= n_out, mu, sigma))


# ------------------------------ wrapper -------------------------------------


def pack_params(params, n_inputs, hidden, n_out):
    """Pack the 5 Linear layers into two lane-dense VMEM slabs."""
    H = hidden
    assert 2 * H + 1 <= LANES, "2*H + bias row must fit in 128 lanes"
    assert 1 + 2 * n_out <= LANES

    k_pad = _round_up(n_inputs + 1, 8)  # features + ones column, sublane-padded

    # slab1: [K_pad, 128] -> rows 0:n_inputs = W1, row n_inputs = b1, rest 0.
    slab1 = jnp.zeros((k_pad, LANES), jnp.float32)
    slab1 = slab1.at[:n_inputs, :H].set(params["wc1"])           # critic -> y lanes 0:H
    slab1 = slab1.at[:n_inputs, H:2 * H].set(params["wa1"])      # actor  -> z lanes H:2H
    slab1 = slab1.at[n_inputs, :H].set(params["bc1"][0])
    slab1 = slab1.at[n_inputs, H:2 * H].set(params["ba1"][0])

    # slab2: [128, 128] block-diagonal head weight + bias row at 2H.
    slab2 = jnp.zeros((LANES, LANES), jnp.float32)
    slab2 = slab2.at[:H, 0:1].set(params["wv"])                               # y -> v
    slab2 = slab2.at[H:2 * H, 1:1 + n_out].set(params["wmu"])                 # z -> mu
    slab2 = slab2.at[H:2 * H, 1 + n_out:1 + 2 * n_out].set(params["wsg"])     # z -> sigma
    slab2 = slab2.at[2 * H, 0].set(params["bv"][0, 0])
    slab2 = slab2.at[2 * H, 1:1 + n_out].set(params["bmu"][0])
    slab2 = slab2.at[2 * H, 1 + n_out:1 + 2 * n_out].set(params["bsg"][0])
    return slab1, slab2, k_pad


def ac_nn_forward(x, params, *, n_inputs, hidden, n_out, batch_tile=256):
    """x: [B, n_inputs] f32. Returns (v, (mu, sigma)) matching the PyTorch module."""
    B = x.shape[0]
    slab1, slab2, k_pad = pack_params(params, n_inputs, hidden, n_out)

    # Pad batch to a sublane multiple, pick a batch tile (multiple of 8).
    b_pad = _round_up(B, 8)
    tb = min(b_pad, _round_up(batch_tile, 8))
    b_pad = _round_up(b_pad, tb)

    x_pad = jnp.zeros((b_pad, k_pad), jnp.float32)
    x_pad = x_pad.at[:B, :n_inputs].set(x.astype(jnp.float32))
    x_pad = x_pad.at[:, n_inputs].set(1.0)  # homogeneous ones column -> layer-1 bias

    kernel = functools.partial(ac_nn_kernel, n_out=n_out, ones_lane=2 * hidden)

    out = pl.pallas_call(
        kernel,
        out_shape=jax.ShapeDtypeStruct((b_pad, LANES), jnp.float32),
        grid=(b_pad // tb,),
        in_specs=[
            pl.BlockSpec((tb, k_pad), lambda i: (i, 0)),        # x tile over batch
            pl.BlockSpec((k_pad, LANES), lambda i: (0, 0)),     # slab1 resident
            pl.BlockSpec((LANES, LANES), lambda i: (0, 0)),     # slab2 resident
        ],
        out_specs=pl.BlockSpec((tb, LANES), lambda i: (i, 0)),
        compiler_params=pltpu.CompilerParams(
            dimension_semantics=("parallel",)),
    )(x_pad, slab1, slab2)

    v = out[:B, 0:1]
    mu = out[:B, 1:1 + n_out]
    sigma = out[:B, 1 + n_out:1 + 2 * n_out]
    return v, (mu, sigma)


# --------------------------- init & reference -------------------------------


def init_params(key, n_inputs, hidden, n_outputs):
    """nn.Linear-style U(-1/sqrt(fan_in), 1/sqrt(fan_in)) init.
    Weights stored pre-transposed as [in, out]; biases as [1, out]."""
    def linear(k, fan_in, fan_out):
        kw, kb = jax.random.split(k)
        bound = 1.0 / jnp.sqrt(fan_in)
        w = jax.random.uniform(kw, (fan_in, fan_out), jnp.float32, -bound, bound)
        b = jax.random.uniform(kb, (1, fan_out), jnp.float32, -bound, bound)
        return w, b

    k1, k2, k3, k4, k5 = jax.random.split(key, 5)
    wa1, ba1 = linear(k1, n_inputs, hidden)   # actor_lin1
    wmu, bmu = linear(k2, hidden, n_outputs)  # mu
    wsg, bsg = linear(k3, hidden, n_outputs)  # sigma
    wc1, bc1 = linear(k4, n_inputs, hidden)   # critic_lin1
    wv, bv = linear(k5, hidden, 1)            # v
    return dict(wa1=wa1, ba1=ba1, wmu=wmu, bmu=bmu, wsg=wsg, bsg=bsg,
                wc1=wc1, bc1=bc1, wv=wv, bv=bv)


def ac_nn_reference(x, p):
    """Pure-JAX reference for correctness check."""
    y = jnp.clip(x @ p["wc1"] + p["bc1"], 0.0, 6.0)
    v = y @ p["wv"] + p["bv"]
    z = jnp.clip(x @ p["wa1"] + p["ba1"], 0.0, 6.0)
    mu = 3.0 * jnp.tanh(z @ p["wmu"] + p["bmu"])
    sigma = jax.nn.softplus(z @ p["wsg"] + p["bsg"]) + SIGMA_MIN
    return v, (mu, sigma)


# --------------------------------- main --------------------------------------

if __name__ == "__main__":
    # Small shapes consistent with the A2C module: state dim 4, hidden 32, 2 actions.
    B, N_INPUTS, HIDDEN, N_OUTPUTS = 8, 4, 32, 2

    key = jax.random.PRNGKey(0)
    kx, kp = jax.random.split(key)
    x = jax.random.normal(kx, (B, N_INPUTS), jnp.float32)
    params = init_params(kp, N_INPUTS, HIDDEN, N_OUTPUTS)

    v, (mu, sigma) = ac_nn_forward(
        x, params, n_inputs=N_INPUTS, hidden=HIDDEN, n_out=N_OUTPUTS)
    jax.block_until_ready((v, mu, sigma))

    # sanity check against pure-JAX reference
    v_ref, (mu_ref, sigma_ref) = ac_nn_reference(x, params)
    assert jnp.allclose(v, v_ref, atol=1e-5), "v mismatch"
    assert jnp.allclose(mu, mu_ref, atol=1e-5), "mu mismatch"
    assert jnp.allclose(sigma, sigma_ref, atol=1e-5), "sigma mismatch"
    assert v.shape == (B, 1) and mu.shape == (B, N_OUTPUTS) and sigma.shape == (B, N_OUTPUTS)

    # also exercise the batch-padding path (B not a multiple of 8)
    x5 = jax.random.normal(jax.random.PRNGKey(1), (5, N_INPUTS), jnp.float32)
    v5, (mu5, sg5) = ac_nn_forward(
        x5, params, n_inputs=N_INPUTS, hidden=HIDDEN, n_out=N_OUTPUTS)
    v5r, (mu5r, sg5r) = ac_nn_reference(x5, params)
    assert jnp.allclose(v5, v5r, atol=1e-5)
    assert jnp.allclose(mu5, mu5r, atol=1e-5)
    assert jnp.allclose(sg5, sg5r, atol=1e-5)

    print("KERNEL_OK")
</pallas_src>

<mosaic_0001>
module attributes {stable_mosaic.version = 11 : i64} {
  func.func @ac_nn_kernel(%arg0: i32, %arg1: memref<8x8xf32, #tpu.memory_space<vmem>>, %arg2: memref<8x128xf32, #tpu.memory_space<vmem>>, %arg3: memref<128x128xf32, #tpu.memory_space<vmem>>, %arg4: memref<8x128xf32, #tpu.memory_space<vmem>>) attributes {dimension_semantics = [#tpu.dimension_semantics<parallel>], iteration_bounds = array<i64: 1>, scalar_prefetch = 0 : i64, scratch_operands = 0 : i64, tpu.core_type = #tpu.core_type<tc>, window_params = [{transform_indices = @transform_0, window_bounds = array<i64: 8, 8>}, {pipeline_mode = #tpu.pipeline_mode<synchronous>, transform_indices = @transform_1, window_bounds = array<i64: 8, 128>}, {pipeline_mode = #tpu.pipeline_mode<synchronous>, transform_indices = @transform_2, window_bounds = array<i64: 128, 128>}, {transform_indices = @transform_3, window_bounds = array<i64: 8, 128>}]} {
    %c0 = arith.constant 0 : index
    %c0_0 = arith.constant 0 : index
    %0 = vector.load %arg1[%c0, %c0_0] : memref<8x8xf32, #tpu.memory_space<vmem>>, vector<8x8xf32>
    %c0_1 = arith.constant 0 : index
    %c0_2 = arith.constant 0 : index
    %1 = vector.load %arg2[%c0_1, %c0_2] : memref<8x128xf32, #tpu.memory_space<vmem>>, vector<8x128xf32>
    %cst = arith.constant dense<0.000000e+00> : vector<8x128xf32>
    %2 = tpu.matmul %0, %1, %cst {dimension_numbers = #tpu.dot_dimension_numbers<[1], [0], [0], [1], [0, 0, 1, 1], [], []>} : vector<8x8xf32>, vector<8x128xf32>, vector<8x128xf32> -> vector<8x128xf32>
    %cst_3 = arith.constant 0.000000e+00 : f32
    %cst_4 = arith.constant 6.000000e+00 : f32
    %3 = vector.broadcast %cst_3 : f32 to vector<8x128xf32>
    %4 = arith.maximumf %3, %2 : vector<8x128xf32>
    %5 = vector.broadcast %cst_4 : f32 to vector<8x128xf32>
    %6 = arith.minimumf %5, %4 : vector<8x128xf32>
    %7 = tpu.iota {dimensions = array<i32: 1>} : vector<8x128xi32>
    %c64_i32 = arith.constant 64 : i32
    %8 = vector.broadcast %c64_i32 : i32 to vector<8x128xi32>
    %9 = arith.cmpi eq, %7, %8 : vector<8x128xi32>
    %cst_5 = arith.constant 1.000000e+00 : f32
    %10 = vector.broadcast %cst_5 : f32 to vector<8x128xf32>
    %11 = arith.select %9, %10, %6 : vector<8x128xi1>, vector<8x128xf32>
    %c0_6 = arith.constant 0 : index
    %c0_7 = arith.constant 0 : index
    %12 = vector.load %arg3[%c0_6, %c0_7] : memref<128x128xf32, #tpu.memory_space<vmem>>, vector<128x128xf32>
    %cst_8 = arith.constant dense<0.000000e+00> : vector<8x128xf32>
    %13 = tpu.matmul %11, %12, %cst_8 {dimension_numbers = #tpu.dot_dimension_numbers<[1], [0], [0], [1], [0, 0, 1, 1], [], []>} : vector<8x128xf32>, vector<128x128xf32>, vector<8x128xf32> -> vector<8x128xf32>
    %14 = math.tanh %13 : vector<8x128xf32>
    %cst_9 = arith.constant 3.000000e+00 : f32
    %15 = vector.broadcast %cst_9 : f32 to vector<8x128xf32>
    %16 = arith.mulf %15, %14 : vector<8x128xf32>
    %cst_10 = arith.constant 0.000000e+00 : f32
    %17 = vector.broadcast %cst_10 : f32 to vector<8x128xf32>
    %18 = arith.maximumf %13, %17 : vector<8x128xf32>
    %19 = math.absf %13 : vector<8x128xf32>
    %cst_11 = arith.constant 0.000000e+00 : f32
    %20 = vector.broadcast %cst_11 : f32 to vector<8x128xf32>
    %21 = arith.subf %20, %19 : vector<8x128xf32>
    %22 = math.exp %21 : vector<8x128xf32>
    %23 = math.log1p %22 : vector<8x128xf32>
    %24 = arith.addf %18, %23 : vector<8x128xf32>
    %cst_12 = arith.constant 1.000000e-03 : f32
    %25 = vector.broadcast %cst_12 : f32 to vector<8x128xf32>
    %26 = arith.addf %24, %25 : vector<8x128xf32>
    %c0_i32 = arith.constant 0 : i32
    %27 = vector.broadcast %c0_i32 : i32 to vector<8x128xi32>
    %28 = arith.cmpi eq, %7, %27 : vector<8x128xi32>
    %c2_i32 = arith.constant 2 : i32
    %29 = vector.broadcast %c2_i32 : i32 to vector<8x128xi32>
    %30 = arith.cmpi sle, %7, %29 : vector<8x128xi32>
    %31 = arith.select %30, %16, %26 : vector<8x128xi1>, vector<8x128xf32>
    %32 = arith.select %28, %13, %31 : vector<8x128xi1>, vector<8x128xf32>
    %c0_13 = arith.constant 0 : index
    %c0_14 = arith.constant 0 : index
    %33 = vector.load %arg4[%c0_13, %c0_14] : memref<8x128xf32, #tpu.memory_space<vmem>>, vector<8x128xf32>
    tpu.vector_store %arg4[%c0_13, %c0_14], %32 {strides = array<i32>} : memref<8x128xf32, #tpu.memory_space<vmem>>, vector<8x128xf32>,
    return
  }
  func.func @transform_0(%arg0: i32) -> (i32, i32) {
    %c0_i32 = arith.constant 0 : i32
    %c0_i32_0 = arith.constant 0 : i32
    return %arg0, %c0_i32 : i32, i32
  }
  func.func @transform_1(%arg0: i32) -> (i32, i32) {
    %c0_i32 = arith.constant 0 : i32
    %c0_i32_0 = arith.constant 0 : i32
    %c0_i32_1 = arith.constant 0 : i32
    return %c0_i32, %c0_i32_0 : i32, i32
  }
  func.func @transform_2(%arg0: i32) -> (i32, i32) {
    %c0_i32 = arith.constant 0 : i32
    %c0_i32_0 = arith.constant 0 : i32
    %c0_i32_1 = arith.constant 0 : i32
    return %c0_i32, %c0_i32_0 : i32, i32
  }
  func.func @transform_3(%arg0: i32) -> (i32, i32) {
    %c0_i32 = arith.constant 0 : i32
    %c0_i32_0 = arith.constant 0 : i32
    return %arg0, %c0_i32 : i32, i32
  }
}

</mosaic_0001>

<llo_original>
// kernel: tpu_custom_call.1
$region0: #{tpu_custom_call.1}
  #allocation0 [shape = 'u32[]', space=smem, size = 0x4, offset = 0x4, fixed_abs, tag = 'smem constant byte address 0x4 - core index']
  #allocation1 [shape = 'u32[72,128]{1,0:T(1,128)}', space=vmem, size = 0x9000, scoped, tag = 'internal scratch']
  %s0 = inlined_call_operand.hbm [shape: f32[8,8], index: 0, kind: input, shape index: {}]
  %s1 = inlined_call_operand.hbm [shape: f32[8,128], index: 1, kind: input, shape index: {}]
  %s2 = inlined_call_operand.hbm [shape: f32[128,128], index: 2, kind: input, shape index: {}]
  %s3 = inlined_call_operand.hbm [shape: f32[8,128], index: 3, kind: output, shape index: {}]
  %s4 = sld [smem:[#allocation0]]
  $region34: #{tpu_custom_call.1} parent=0
    _
  %s6 = ssub.s32 1, %s4
  %s7 = scalar_select 0, %s6, %s4
  $region1: #{tpu_custom_call.1} parent=0
    #allocation2 [shape = 'u8[4096]{0}', space=vmem, size = 0x1000, scoped, tag = 'input window, operand 0, single buffered']
    #allocation3 [shape = 's32[1]{0}', space=sflag, size = 0x4, scoped, tag = 'scoped memory for tpu_custom_call.1']
    #allocation4 [shape = 's32[1]{0}', space=sflag, size = 0x4, scoped, tag = 'scoped memory for tpu_custom_call.1']
    #allocation5 [shape = 'u8[4096]{0}', space=vmem, size = 0x1000, scoped, tag = 'input window, operand 1, single buffered']
    #allocation6 [shape = 's32[1]{0}', space=sflag, size = 0x4, scoped, tag = 'scoped memory for tpu_custom_call.1']
    #allocation7 [shape = 'u8[65536]{0}', space=vmem, size = 0x10000, scoped, tag = 'input window, operand 2, single buffered']
    #allocation8 [shape = 'u8[4096]{0}', space=vmem, size = 0x1000, scoped, tag = 'output window, operand 0, single buffered']
    %8 = vsyncpa [#allocation3], 0
    %9 = vsyncpa [#allocation6], 0
    %10 = vsyncpa [#allocation4], 0
    // Predicated region
    $region2: #{tpu_custom_call.1} parent=1 // pred_check
      _
    $region3: #{tpu_custom_call.1} parent=1 // pred_check_branch
      %12 = sbr.rel (0) target = $region5
    $region4: #{tpu_custom_call.1} parent=1 // pred_region
      %14 = vsyncadd [#allocation3], 0
      %s16 = sshll.u32 %s0, 4
      %s17 = int_to_ptr.hbm [resolvable:$true] %s16
      %s18 = sshll.u32 [#allocation2], 4
      %s19 = int_to_ptr.vmem [resolvable:$true] %s18
      %21 = dma.hbm_to_vmem [thread:$0]  %s17, 128, %s19, [#allocation3]
    $region5: #{tpu_custom_call.1} parent=1 // pred_fallthru
      _
    // Predicated region
    $region6: #{tpu_custom_call.1} parent=1 // pred_check
      _
    $region7: #{tpu_custom_call.1} parent=1 // pred_check_branch
      %23 = sbr.rel (0) target = $region9
    $region8: #{tpu_custom_call.1} parent=1 // pred_region
      %25 = vsyncadd [#allocation6], 0
      %s27 = sshll.u32 %s1, 4
      %s28 = int_to_ptr.hbm [resolvable:$true] %s27
      %s29 = sshll.u32 [#allocation5], 4
      %s30 = int_to_ptr.vmem [resolvable:$true] %s29
      %32 = dma.hbm_to_vmem [thread:$0]  %s28, 128, %s30, [#allocation6]
    $region9: #{tpu_custom_call.1} parent=1 // pred_fallthru
      _
    // Predicated region
    $region10: #{tpu_custom_call.1} parent=1 // pred_check
      _
    $region11: #{tpu_custom_call.1} parent=1 // pred_check_branch
      %34 = sbr.rel (0) target = $region13
    $region12: #{tpu_custom_call.1} parent=1 // pred_region
      %36 = vsyncadd [#allocation6], 0
      %s37 = sshll.u32 %s2, 4
      %s38 = int_to_ptr.hbm [resolvable:$true] %s37
      %s39 = sshll.u32 [#allocation7], 4
      %s40 = int_to_ptr.vmem [resolvable:$true] %s39
      %45 = dma.hbm_to_vmem [thread:$0]  %s38, 2048, %s40, [#allocation6], 128, 128, 8
    $region13: #{tpu_custom_call.1} parent=1 // pred_fallthru
      _
    // Predicated region
    $region14: #{tpu_custom_call.1} parent=1 // pred_check
      _
    $region15: #{tpu_custom_call.1} parent=1 // pred_check_branch
      %47 = sbr.rel (0) target = $region17
    $region16: #{tpu_custom_call.1} parent=1 // pred_region
      %49 = dma.done [#allocation3], 128
    $region17: #{tpu_custom_call.1} parent=1 // pred_fallthru
      _
    // Predicated region
    $region18: #{tpu_custom_call.1} parent=1 // pred_check
      _
    $region19: #{tpu_custom_call.1} parent=1 // pred_check_branch
      %51 = sbr.rel (0) target = $region21
    $region20: #{tpu_custom_call.1} parent=1 // pred_region
      %53 = dma.done [#allocation6], 128
    $region21: #{tpu_custom_call.1} parent=1 // pred_fallthru
      _
    // Predicated region
    $region22: #{tpu_custom_call.1} parent=1 // pred_check
      _
    $region23: #{tpu_custom_call.1} parent=1 // pred_check_branch
      %55 = sbr.rel (0) target = $region25
    $region24: #{tpu_custom_call.1} parent=1 // pred_region
      %57 = dma.done [#allocation6], 2048
    $region25: #{tpu_custom_call.1} parent=1 // pred_fallthru
      _
    %v58 = vld [vmem:[#allocation2] sm:$0xff]
    %v59 = vld [vmem:[#allocation5] sm:$0xff]
    %vm60 = vcmask 64512
    %v62 = vsel %vm60, %v58, 0
    %64 = vmatpush.msra.mxu0 0.0
    %65 = vmatpush.msra.mxu0 0.0
    %66 = vmatpush.msra.mxu0 0.0
    %67 = vmatpush.msra.mxu0 0.0
    %68 = vmatpush.msra.mxu0 0.0
    %69 = vmatpush.msra.mxu0 0.0
    %70 = vmatpush.msra.mxu0 0.0
    %71 = vmatpush.msra.mxu0 0.0
    %72 = vmatpush.msra.mxu0 0.0
    %73 = vmatpush.msra.mxu0 0.0
    %74 = vmatpush.msra.mxu0 0.0
    %75 = vmatpush.msra.mxu0 0.0
    %76 = vmatpush.msra.mxu0 0.0
    %77 = vmatpush.msra.mxu0 0.0
    %78 = vmatpush.msra.mxu0 0.0
    %79 = vmatpush.msra.mxu0 %v59
    %80 = vmatmul.f32.gmra.mxu0 %v62
    %v81 = vpop.f32.mrf.mxu0
    %v82 = vadd.f32 0.0, %v81
    %83 = vdwg.mxu0
    %v84 = vmax.f32 %v82, 0.0
    %v85 = vmin.f32 %v84, 6.0
    %v86 = vlaneseq
    %v87 = vand.u32 %v86, 127
    %vm88 = vcmp.eq.s32.totalorder %v87, 64
    %v89 = vsel %vm88, 1.0, %v85
    %v90 = vld [vmem:[#allocation7] sm:$0xff]
    %v91 = vld [vmem:[#allocation7 + $0x8] sm:$0xff]
    %v92 = vld [vmem:[#allocation7 + $0x10] sm:$0xff]
    %v93 = vld [vmem:[#allocation7 + $0x18] sm:$0xff]
    %v94 = vld [vmem:[#allocation7 + $0x20] sm:$0xff]
    %v95 = vld [vmem:[#allocation7 + $0x28] sm:$0xff]
    %v96 = vld [vmem:[#allocation7 + $0x30] sm:$0xff]
    %v97 = vld [vmem:[#allocation7 + $0x38] sm:$0xff]
    %v98 = vld [vmem:[#allocation7 + $0x40] sm:$0xff]
    %v99 = vld [vmem:[#allocation7 + $0x48] sm:$0xff]
    %v100 = vld [vmem:[#allocation7 + $0x50] sm:$0xff]
    %v101 = vld [vmem:[#allocation7 + $0x58] sm:$0xff]
    %v102 = vld [vmem:[#allocation7 + $0x60] sm:$0xff]
    %v103 = vld [vmem:[#allocation7 + $0x68] sm:$0xff]
    %v104 = vld [vmem:[#allocation7 + $0x70] sm:$0xff]
    %v105 = vld [vmem:[#allocation7 + $0x78] sm:$0xff]
    %106 = vmatpush.msra.mxu0 %v105
    %107 = vmatpush.msra.mxu0 %v104
    %108 = vmatpush.msra.mxu0 %v103
    %109 = vmatpush.msra.mxu0 %v102
    %110 = vmatpush.msra.mxu0 %v101
    %111 = vmatpush.msra.mxu0 %v100
    %112 = vmatpush.msra.mxu0 %v99
    %113 = vmatpush.msra.mxu0 %v98
    %114 = vmatpush.msra.mxu0 %v97
    %115 = vmatpush.msra.mxu0 %v96
    %116 = vmatpush.msra.mxu0 %v95
    %117 = vmatpush.msra.mxu0 %v94
    %118 = vmatpush.msra.mxu0 %v93
    %119 = vmatpush.msra.mxu0 %v92
    %120 = vmatpush.msra.mxu0 %v91
    %121 = vmatpush.msra.mxu0 %v90
    %122 = vmatmul.f32.gmra.mxu0 %v89
    %v123 = vpop.f32.mrf.mxu0
    %v124 = vadd.f32 0.0, %v123
    %125 = vdwg.mxu0
    %v126 = vtanh.pop %v124
    %v127 = vmul.f32 %v126, 3.0
    %v128 = vmax.f32 %v124, 0.0
    %v129 = vand.u32 2147483647, %v124
    %v130 = vsub.f32 0.0, %v129
    %v131 = vmul.f32 %v130, 1.442695
    %v132 = vpow.pop %v131
    %v133 = vadd.f32 %v132, 1.0
    %v134 = vlog2.pop %v133
    %v135 = vmul.f32 %v134, 0.6931472
    %v136 = vmul.f32 -0.5, %v132
    %v137 = vadd.f32 %v136, 1.0
    %v138 = vmul.f32 %v137, %v132
    %v139 = vand.u32 2147483647, %v132
    %vm140 = vcmp.lt.f32.partialorder %v139, 0.0004427343
    %v141 = vsel %vm140, %v138, %v135
    %v142 = vadd.f32 %v128, %v141
    %v143 = vadd.f32 %v142, 0.001
    %vm144 = vcmp.eq.s32.totalorder %v87, 0
    %vm145 = vcmp.le.s32.totalorder %v87, 2
    %v146 = vsel %vm145, %v127, %v143
    %v147 = vsel %vm144, %v124, %v146
    %148 = vst [vmem:[#allocation8] sm:$0xff] %v147
    // Predicated region
    $region26: #{tpu_custom_call.1} parent=1 // pred_check
      _
    $region27: #{tpu_custom_call.1} parent=1 // pred_check_branch
      %150 = sbr.rel (0) target = $region29
    $region28: #{tpu_custom_call.1} parent=1 // pred_region
      %152 = vsyncadd [#allocation4], 0
      %s154 = sshll.u32 [#allocation8], 4
      %s155 = int_to_ptr.vmem [resolvable:$true] %s154
      %s156 = sshll.u32 %s3, 4
      %s157 = int_to_ptr.hbm [resolvable:$true] %s156
      %159 = dma.vmem_to_hbm [thread:$0]  %s155, 128, %s157, [#allocation4]
    $region29: #{tpu_custom_call.1} parent=1 // pred_fallthru
      _
    // Predicated region
    $region30: #{tpu_custom_call.1} parent=1 // pred_check
      _
    $region31: #{tpu_custom_call.1} parent=1 // pred_check_branch
      %161 = sbr.rel (0) target = $region33
    $region32: #{tpu_custom_call.1} parent=1 // pred_region
      %163 = dma.done [#allocation4], 128
    $region33: #{tpu_custom_call.1} parent=1 // pred_fallthru
      _
    %164 = vsyncpa [#allocation3], 1
    %165 = vsyncpa [#allocation6], 1
    %166 = vsyncpa [#allocation4], 1

</llo_original>
